<compile_context>
chip_gen: v7x
topology: tpu7x:2x2x1
jax: 0.10.0
libtpu: 0.0.40
codegen_flags: <defaults>
</compile_context>

<pallas_src>
import jax
import jax.numpy as jnp
from jax.experimental import pallas as pl
from jax.experimental.pallas import tpu as pltpu

LN_EPS = 1e-5


def _layer_norm_cols(h, gamma, beta):
    """LayerNorm over the feature axis of a (features, batch) tile. f32 math."""
    mu = jnp.mean(h, axis=0, keepdims=True)
    var = jnp.mean((h - mu) * (h - mu), axis=0, keepdims=True)
    return (h - mu) * jax.lax.rsqrt(var + LN_EPS) * gamma + beta


def mlp_kernel(xT_ref,
               w1_ref, b1_ref, g1_ref, be1_ref,
               w2_ref, b2_ref, g2_ref, be2_ref,
               wo_ref, bo_ref,
               oT_ref):
    """One batch tile (columns = samples): Linear->ReLU->LN x2, then Linear."""
    xT = xT_ref[...]                                              # (in_dim, Bt) bf16

    # hidden layer 1
    h = jnp.dot(w1_ref[...], xT, preferred_element_type=jnp.float32) + b1_ref[...]
    h = jnp.maximum(h, 0.0)
    h = _layer_norm_cols(h, g1_ref[...], be1_ref[...])
    h = h.astype(w2_ref.dtype)                                    # bf16 feed to MXU

    # hidden layer 2
    h = jnp.dot(w2_ref[...], h, preferred_element_type=jnp.float32) + b2_ref[...]
    h = jnp.maximum(h, 0.0)
    h = _layer_norm_cols(h, g2_ref[...], be2_ref[...])
    h = h.astype(wo_ref.dtype)

    # output projection
    out = jnp.dot(wo_ref[...], h, preferred_element_type=jnp.float32) + bo_ref[...]
    oT_ref[...] = out.astype(oT_ref.dtype)                        # lane-dense store


def mlp_layer_forward(inputs, params, *, row_tile=256, stream_dtype=jnp.bfloat16):
    """inputs: list of (B, D_i) arrays, concatenated on axis 1 (torch.cat(input, 1))."""
    x = jnp.concatenate(inputs, axis=1)                 # glue stays in plain JAX
    out_dtype = x.dtype
    B, in_dim = x.shape

    (w1, b1, g1, be1, w2, b2, g2, be2, wo, bo) = params
    h1, h2, out_dim = w1.shape[0], w2.shape[0], wo.shape[0]

    # --- tile-size policy: batch lives on the 128-lane axis -------------------
    row_tile = max(128, (row_tile // 128) * 128)
    row_tile = min(row_tile, 128 * pl.cdiv(B, 128))     # don't over-pad tiny batches
    if pl.cdiv(B, row_tile) < 2 and B > 128:            # >=2 parallel steps (v7x 2 TCs)
        row_tile = 128 * pl.cdiv(pl.cdiv(B, 2), 128)
    grid_n = pl.cdiv(B, row_tile)
    Bp = grid_n * row_tile

    if Bp != B:
        x = jnp.pad(x, ((0, Bp - B), (0, 0)))
    xT = x.T.astype(stream_dtype)                       # (in_dim, Bp), lane-dense tiles

    # Stream matmul operands in bf16; bias / LN params (and epilogue) stay f32.
    w1c, w2c, woc = (w.astype(stream_dtype) for w in (w1, w2, wo))
    b1c, g1c, be1c = (a.astype(jnp.float32) for a in (b1, g1, be1))
    b2c, g2c, be2c = (a.astype(jnp.float32) for a in (b2, g2, be2))
    boc = bo.astype(jnp.float32)

    # Constant index_map => block never changes => no re-DMA across grid steps.
    const = lambda shape: pl.BlockSpec(shape, lambda i: (0, 0))

    flops = 2 * Bp * (in_dim * h1 + h1 * h2 + h2 * out_dim)
    bytes_accessed = (xT.size * xT.dtype.itemsize
                      + Bp * out_dim * jnp.dtype(out_dtype).itemsize
                      + sum(a.size * a.dtype.itemsize
                            for a in (w1c, b1c, g1c, be1c,
                                      w2c, b2c, g2c, be2c, woc, boc)))

    outT = pl.pallas_call(
        mlp_kernel,
        out_shape=jax.ShapeDtypeStruct((out_dim, Bp), out_dtype),
        grid_spec=pltpu.PrefetchScalarGridSpec(
            num_scalar_prefetch=0,
            grid=(grid_n,),
            in_specs=[
                pl.BlockSpec((in_dim, row_tile), lambda i: (0, i)),   # x.T batch tile
                const((h1, in_dim)), const((h1, 1)), const((h1, 1)), const((h1, 1)),
                const((h2, h1)),     const((h2, 1)), const((h2, 1)), const((h2, 1)),
                const((out_dim, h2)), const((out_dim, 1)),
            ],
            out_specs=pl.BlockSpec((out_dim, row_tile), lambda i: (0, i)),
        ),
        compiler_params=pltpu.CompilerParams(
            dimension_semantics=("parallel",)),
        cost_estimate=pl.CostEstimate(flops=flops, transcendentals=2 * Bp,
                                      bytes_accessed=bytes_accessed),
    )(xT, w1c, b1c, g1c, be1c, w2c, b2c, g2c, be2c, woc, boc)

    return outT.T[:B]                                   # back to (B, out_dim)


def init_params(key, in_dim, hidden_dims, out_dim, dtype=jnp.float32):
    """nn.Linear-style init (uniform +/- 1/sqrt(fan_in)).  Weights are kept in
    PyTorch orientation (out_features, in_features); biases and LayerNorm
    params are stored as (out, 1) columns (batch sits on the lane axis)."""
    params = []
    dims = [in_dim] + list(hidden_dims)
    keys = jax.random.split(key, 2 * (len(hidden_dims) + 1))
    ki = 0
    for d_in, d_out in zip(dims[:-1], dims[1:]):
        bound = 1.0 / (d_in ** 0.5)
        w = jax.random.uniform(keys[ki], (d_out, d_in), dtype, -bound, bound); ki += 1
        b = jax.random.uniform(keys[ki], (d_out, 1), dtype, -bound, bound);    ki += 1
        params.extend([w, b, jnp.ones((d_out, 1), dtype), jnp.zeros((d_out, 1), dtype)])
    d_in = dims[-1]
    bound = 1.0 / (d_in ** 0.5)
    wo = jax.random.uniform(keys[ki], (out_dim, d_in), dtype, -bound, bound); ki += 1
    bo = jax.random.uniform(keys[ki], (out_dim, 1), dtype, -bound, bound)
    params.extend([wo, bo])
    return tuple(params)


def reference_forward(inputs, params, *, stream_dtype=jnp.bfloat16):
    """Pure-JAX reference using the same bf16-stream / f32-epilogue recipe."""
    x = jnp.concatenate(inputs, axis=1)
    (w1, b1, g1, be1, w2, b2, g2, be2, wo, bo) = params

    def ln(h, gamma, beta):
        mu = jnp.mean(h, axis=-1, keepdims=True)
        var = jnp.mean((h - mu) * (h - mu), axis=-1, keepdims=True)
        return (h - mu) * jax.lax.rsqrt(var + LN_EPS) * gamma[:, 0] + beta[:, 0]

    h = x.astype(stream_dtype)
    h = jnp.dot(h, w1.astype(stream_dtype).T,
                preferred_element_type=jnp.float32) + b1[:, 0]
    h = ln(jnp.maximum(h, 0.0), g1, be1).astype(stream_dtype)
    h = jnp.dot(h, w2.astype(stream_dtype).T,
                preferred_element_type=jnp.float32) + b2[:, 0]
    h = ln(jnp.maximum(h, 0.0), g2, be2).astype(stream_dtype)
    return jnp.dot(h, wo.astype(stream_dtype).T,
                   preferred_element_type=jnp.float32) + bo[:, 0]


if __name__ == "__main__":
    key = jax.random.PRNGKey(0)
    k_p, k_x1, k_x2 = jax.random.split(key, 3)

    B = 500                       # not a multiple of the tile -> exercises padding
    d1, d2 = 16, 16               # torch.cat(input, 1) -> in_dim = 32
    hidden_dims = [32, 32]
    out_dim = 16

    x1 = jax.random.normal(k_x1, (B, d1), jnp.float32)
    x2 = jax.random.normal(k_x2, (B, d2), jnp.float32)
    params = init_params(k_p, d1 + d2, hidden_dims, out_dim)

    out = mlp_layer_forward([x1, x2], params, row_tile=256)
    out = jax.block_until_ready(out)

    ref = reference_forward([x1, x2], params)
    assert out.shape == (B, out_dim)
    assert jnp.allclose(out.astype(jnp.float32), ref, atol=1e-3, rtol=1e-3), \
        float(jnp.max(jnp.abs(out.astype(jnp.float32) - ref)))

    print("KERNEL_OK")
</pallas_src>

<mosaic_0001>
module attributes {stable_mosaic.version = 11 : i64} {
  func.func @mlp_kernel(%arg0: i32, %arg1: memref<32x256xbf16, #tpu.memory_space<vmem>>, %arg2: memref<32x32xbf16, #tpu.memory_space<vmem>>, %arg3: memref<32x1xf32, #tpu.memory_space<vmem>>, %arg4: memref<32x1xf32, #tpu.memory_space<vmem>>, %arg5: memref<32x1xf32, #tpu.memory_space<vmem>>, %arg6: memref<32x32xbf16, #tpu.memory_space<vmem>>, %arg7: memref<32x1xf32, #tpu.memory_space<vmem>>, %arg8: memref<32x1xf32, #tpu.memory_space<vmem>>, %arg9: memref<32x1xf32, #tpu.memory_space<vmem>>, %arg10: memref<16x32xbf16, #tpu.memory_space<vmem>>, %arg11: memref<16x1xf32, #tpu.memory_space<vmem>>, %arg12: memref<16x256xf32, #tpu.memory_space<vmem>>) attributes {dimension_semantics = [#tpu.dimension_semantics<parallel>], iteration_bounds = array<i64: 2>, scalar_prefetch = 0 : i64, scratch_operands = 0 : i64, tpu.core_type = #tpu.core_type<tc>, window_params = [{transform_indices = @transform_0, window_bounds = array<i64: 32, 256>}, {pipeline_mode = #tpu.pipeline_mode<synchronous>, transform_indices = @transform_1, window_bounds = array<i64: 32, 32>}, {pipeline_mode = #tpu.pipeline_mode<synchronous>, transform_indices = @transform_2, window_bounds = array<i64: 32, 1>}, {pipeline_mode = #tpu.pipeline_mode<synchronous>, transform_indices = @transform_3, window_bounds = array<i64: 32, 1>}, {pipeline_mode = #tpu.pipeline_mode<synchronous>, transform_indices = @transform_4, window_bounds = array<i64: 32, 1>}, {pipeline_mode = #tpu.pipeline_mode<synchronous>, transform_indices = @transform_5, window_bounds = array<i64: 32, 32>}, {pipeline_mode = #tpu.pipeline_mode<synchronous>, transform_indices = @transform_6, window_bounds = array<i64: 32, 1>}, {pipeline_mode = #tpu.pipeline_mode<synchronous>, transform_indices = @transform_7, window_bounds = array<i64: 32, 1>}, {pipeline_mode = #tpu.pipeline_mode<synchronous>, transform_indices = @transform_8, window_bounds = array<i64: 32, 1>}, {pipeline_mode = #tpu.pipeline_mode<synchronous>, transform_indices = @transform_9, window_bounds = array<i64: 16, 32>}, {pipeline_mode = #tpu.pipeline_mode<synchronous>, transform_indices = @transform_10, window_bounds = array<i64: 16, 1>}, {transform_indices = @transform_11, window_bounds = array<i64: 16, 256>}]} {
    %c0 = arith.constant 0 : index
    %c0_0 = arith.constant 0 : index
    %0 = vector.load %arg1[%c0, %c0_0] : memref<32x256xbf16, #tpu.memory_space<vmem>>, vector<32x256xbf16>
    %c0_1 = arith.constant 0 : index
    %c0_2 = arith.constant 0 : index
    %1 = vector.load %arg2[%c0_1, %c0_2] : memref<32x32xbf16, #tpu.memory_space<vmem>>, vector<32x32xbf16>
    %cst = arith.constant dense<0.000000e+00> : vector<32x256xf32>
    %2 = tpu.matmul %1, %0, %cst {dimension_numbers = #tpu.dot_dimension_numbers<[1], [0], [0], [1], [0, 0, 1, 1], [], []>} : vector<32x32xbf16>, vector<32x256xbf16>, vector<32x256xf32> -> vector<32x256xf32>
    %c0_3 = arith.constant 0 : index
    %c0_4 = arith.constant 0 : index
    %3 = vector.load %arg3[%c0_3, %c0_4] : memref<32x1xf32, #tpu.memory_space<vmem>>, vector<32x1xf32>
    %4 = vector.broadcast %3 : vector<32x1xf32> to vector<32x256xf32>
    %5 = arith.addf %2, %4 : vector<32x256xf32>
    %cst_5 = arith.constant 0.000000e+00 : f32
    %6 = vector.broadcast %cst_5 : f32 to vector<32x256xf32>
    %7 = arith.maximumf %5, %6 : vector<32x256xf32>
    %c0_6 = arith.constant 0 : index
    %c0_7 = arith.constant 0 : index
    %8 = vector.load %arg4[%c0_6, %c0_7] : memref<32x1xf32, #tpu.memory_space<vmem>>, vector<32x1xf32>
    %c0_8 = arith.constant 0 : index
    %c0_9 = arith.constant 0 : index
    %9 = vector.load %arg5[%c0_8, %c0_9] : memref<32x1xf32, #tpu.memory_space<vmem>>, vector<32x1xf32>
    %cst_10 = arith.constant dense<0.000000e+00> : vector<256xf32>
    %10 = vector.multi_reduction <add>, %7, %cst_10 [0] : vector<32x256xf32> to vector<256xf32>
    %11 = vector.shape_cast %10 : vector<256xf32> to vector<1x256xf32>
    %cst_11 = arith.constant 3.200000e+01 : f32
    %12 = vector.broadcast %cst_11 : f32 to vector<1x256xf32>
    %13 = arith.divf %11, %12 : vector<1x256xf32>
    %14 = vector.broadcast %13 : vector<1x256xf32> to vector<32x256xf32>
    %15 = arith.subf %7, %14 : vector<32x256xf32>
    %16 = vector.broadcast %13 : vector<1x256xf32> to vector<32x256xf32>
    %17 = arith.subf %7, %16 : vector<32x256xf32>
    %18 = arith.mulf %15, %17 : vector<32x256xf32>
    %cst_12 = arith.constant dense<0.000000e+00> : vector<256xf32>
    %19 = vector.multi_reduction <add>, %18, %cst_12 [0] : vector<32x256xf32> to vector<256xf32>
    %20 = vector.shape_cast %19 : vector<256xf32> to vector<1x256xf32>
    %cst_13 = arith.constant 3.200000e+01 : f32
    %21 = vector.broadcast %cst_13 : f32 to vector<1x256xf32>
    %22 = arith.divf %20, %21 : vector<1x256xf32>
    %23 = vector.broadcast %13 : vector<1x256xf32> to vector<32x256xf32>
    %24 = arith.subf %7, %23 : vector<32x256xf32>
    %cst_14 = arith.constant 9.99999974E-6 : f32
    %25 = vector.broadcast %cst_14 : f32 to vector<1x256xf32>
    %26 = arith.addf %22, %25 : vector<1x256xf32>
    %27 = math.rsqrt %26 : vector<1x256xf32>
    %28 = vector.broadcast %27 : vector<1x256xf32> to vector<32x256xf32>
    %29 = arith.mulf %24, %28 : vector<32x256xf32>
    %30 = vector.broadcast %8 : vector<32x1xf32> to vector<32x256xf32>
    %31 = arith.mulf %29, %30 : vector<32x256xf32>
    %32 = vector.broadcast %9 : vector<32x1xf32> to vector<32x256xf32>
    %33 = arith.addf %31, %32 : vector<32x256xf32>
    %34 = arith.truncf %33 : vector<32x256xf32> to vector<32x256xbf16>
    %c0_15 = arith.constant 0 : index
    %c0_16 = arith.constant 0 : index
    %35 = vector.load %arg6[%c0_15, %c0_16] : memref<32x32xbf16, #tpu.memory_space<vmem>>, vector<32x32xbf16>
    %cst_17 = arith.constant dense<0.000000e+00> : vector<32x256xf32>
    %36 = tpu.matmul %35, %34, %cst_17 {dimension_numbers = #tpu.dot_dimension_numbers<[1], [0], [0], [1], [0, 0, 1, 1], [], []>} : vector<32x32xbf16>, vector<32x256xbf16>, vector<32x256xf32> -> vector<32x256xf32>
    %c0_18 = arith.constant 0 : index
    %c0_19 = arith.constant 0 : index
    %37 = vector.load %arg7[%c0_18, %c0_19] : memref<32x1xf32, #tpu.memory_space<vmem>>, vector<32x1xf32>
    %38 = vector.broadcast %37 : vector<32x1xf32> to vector<32x256xf32>
    %39 = arith.addf %36, %38 : vector<32x256xf32>
    %cst_20 = arith.constant 0.000000e+00 : f32
    %40 = vector.broadcast %cst_20 : f32 to vector<32x256xf32>
    %41 = arith.maximumf %39, %40 : vector<32x256xf32>
    %c0_21 = arith.constant 0 : index
    %c0_22 = arith.constant 0 : index
    %42 = vector.load %arg8[%c0_21, %c0_22] : memref<32x1xf32, #tpu.memory_space<vmem>>, vector<32x1xf32>
    %c0_23 = arith.constant 0 : index
    %c0_24 = arith.constant 0 : index
    %43 = vector.load %arg9[%c0_23, %c0_24] : memref<32x1xf32, #tpu.memory_space<vmem>>, vector<32x1xf32>
    %cst_25 = arith.constant dense<0.000000e+00> : vector<256xf32>
    %44 = vector.multi_reduction <add>, %41, %cst_25 [0] : vector<32x256xf32> to vector<256xf32>
    %45 = vector.shape_cast %44 : vector<256xf32> to vector<1x256xf32>
    %cst_26 = arith.constant 3.200000e+01 : f32
    %46 = vector.broadcast %cst_26 : f32 to vector<1x256xf32>
    %47 = arith.divf %45, %46 : vector<1x256xf32>
    %48 = vector.broadcast %47 : vector<1x256xf32> to vector<32x256xf32>
    %49 = arith.subf %41, %48 : vector<32x256xf32>
    %50 = vector.broadcast %47 : vector<1x256xf32> to vector<32x256xf32>
    %51 = arith.subf %41, %50 : vector<32x256xf32>
    %52 = arith.mulf %49, %51 : vector<32x256xf32>
    %cst_27 = arith.constant dense<0.000000e+00> : vector<256xf32>
    %53 = vector.multi_reduction <add>, %52, %cst_27 [0] : vector<32x256xf32> to vector<256xf32>
    %54 = vector.shape_cast %53 : vector<256xf32> to vector<1x256xf32>
    %cst_28 = arith.constant 3.200000e+01 : f32
    %55 = vector.broadcast %cst_28 : f32 to vector<1x256xf32>
    %56 = arith.divf %54, %55 : vector<1x256xf32>
    %57 = vector.broadcast %47 : vector<1x256xf32> to vector<32x256xf32>
    %58 = arith.subf %41, %57 : vector<32x256xf32>
    %cst_29 = arith.constant 9.99999974E-6 : f32
    %59 = vector.broadcast %cst_29 : f32 to vector<1x256xf32>
    %60 = arith.addf %56, %59 : vector<1x256xf32>
    %61 = math.rsqrt %60 : vector<1x256xf32>
    %62 = vector.broadcast %61 : vector<1x256xf32> to vector<32x256xf32>
    %63 = arith.mulf %58, %62 : vector<32x256xf32>
    %64 = vector.broadcast %42 : vector<32x1xf32> to vector<32x256xf32>
    %65 = arith.mulf %63, %64 : vector<32x256xf32>
    %66 = vector.broadcast %43 : vector<32x1xf32> to vector<32x256xf32>
    %67 = arith.addf %65, %66 : vector<32x256xf32>
    %68 = arith.truncf %67 : vector<32x256xf32> to vector<32x256xbf16>
    %c0_30 = arith.constant 0 : index
    %c0_31 = arith.constant 0 : index
    %69 = vector.load %arg10[%c0_30, %c0_31] : memref<16x32xbf16, #tpu.memory_space<vmem>>, vector<16x32xbf16>
    %cst_32 = arith.constant dense<0.000000e+00> : vector<16x256xf32>
    %70 = tpu.matmul %69, %68, %cst_32 {dimension_numbers = #tpu.dot_dimension_numbers<[1], [0], [0], [1], [0, 0, 1, 1], [], []>} : vector<16x32xbf16>, vector<32x256xbf16>, vector<16x256xf32> -> vector<16x256xf32>
    %c0_33 = arith.constant 0 : index
    %c0_34 = arith.constant 0 : index
    %71 = vector.load %arg11[%c0_33, %c0_34] : memref<16x1xf32, #tpu.memory_space<vmem>>, vector<16x1xf32>
    %72 = vector.broadcast %71 : vector<16x1xf32> to vector<16x256xf32>
    %73 = arith.addf %70, %72 : vector<16x256xf32>
    %c0_35 = arith.constant 0 : index
    %c0_36 = arith.constant 0 : index
    %74 = vector.load %arg12[%c0_35, %c0_36] : memref<16x256xf32, #tpu.memory_space<vmem>>, vector<16x256xf32>
    tpu.vector_store %arg12[%c0_35, %c0_36], %73 {strides = array<i32>} : memref<16x256xf32, #tpu.memory_space<vmem>>, vector<16x256xf32>,
    return
  }
  func.func @transform_0(%arg0: i32) -> (i32, i32) {
    %c0_i32 = arith.constant 0 : i32
    %c0_i32_0 = arith.constant 0 : i32
    return %c0_i32, %arg0 : i32, i32
  }
  func.func @transform_1(%arg0: i32) -> (i32, i32) {
    %c0_i32 = arith.constant 0 : i32
    %c0_i32_0 = arith.constant 0 : i32
    %c0_i32_1 = arith.constant 0 : i32
    return %c0_i32, %c0_i32_0 : i32, i32
  }
  func.func @transform_2(%arg0: i32) -> (i32, i32) {
    %c0_i32 = arith.constant 0 : i32
    %c0_i32_0 = arith.constant 0 : i32
    %c0_i32_1 = arith.constant 0 : i32
    return %c0_i32, %c0_i32_0 : i32, i32
  }
  func.func @transform_3(%arg0: i32) -> (i32, i32) {
    %c0_i32 = arith.constant 0 : i32
    %c0_i32_0 = arith.constant 0 : i32
    %c0_i32_1 = arith.constant 0 : i32
    return %c0_i32, %c0_i32_0 : i32, i32
  }
  func.func @transform_4(%arg0: i32) -> (i32, i32) {
    %c0_i32 = arith.constant 0 : i32
    %c0_i32_0 = arith.constant 0 : i32
    %c0_i32_1 = arith.constant 0 : i32
    return %c0_i32, %c0_i32_0 : i32, i32
  }
  func.func @transform_5(%arg0: i32) -> (i32, i32) {
    %c0_i32 = arith.constant 0 : i32
    %c0_i32_0 = arith.constant 0 : i32
    %c0_i32_1 = arith.constant 0 : i32
    return %c0_i32, %c0_i32_0 : i32, i32
  }
  func.func @transform_6(%arg0: i32) -> (i32, i32) {
    %c0_i32 = arith.constant 0 : i32
    %c0_i32_0 = arith.constant 0 : i32
    %c0_i32_1 = arith.constant 0 : i32
    return %c0_i32, %c0_i32_0 : i32, i32
  }
  func.func @transform_7(%arg0: i32) -> (i32, i32) {
    %c0_i32 = arith.constant 0 : i32
    %c0_i32_0 = arith.constant 0 : i32
    %c0_i32_1 = arith.constant 0 : i32
    return %c0_i32, %c0_i32_0 : i32, i32
  }
  func.func @transform_8(%arg0: i32) -> (i32, i32) {
    %c0_i32 = arith.constant 0 : i32
    %c0_i32_0 = arith.constant 0 : i32
    %c0_i32_1 = arith.constant 0 : i32
    return %c0_i32, %c0_i32_0 : i32, i32
  }
  func.func @transform_9(%arg0: i32) -> (i32, i32) {
    %c0_i32 = arith.constant 0 : i32
    %c0_i32_0 = arith.constant 0 : i32
    %c0_i32_1 = arith.constant 0 : i32
    return %c0_i32, %c0_i32_0 : i32, i32
  }
  func.func @transform_10(%arg0: i32) -> (i32, i32) {
    %c0_i32 = arith.constant 0 : i32
    %c0_i32_0 = arith.constant 0 : i32
    %c0_i32_1 = arith.constant 0 : i32
    return %c0_i32, %c0_i32_0 : i32, i32
  }
  func.func @transform_11(%arg0: i32) -> (i32, i32) {
    %c0_i32 = arith.constant 0 : i32
    %c0_i32_0 = arith.constant 0 : i32
    return %c0_i32, %arg0 : i32, i32
  }
}

</mosaic_0001>

<llo_original>
// kernel: tpu_custom_call.1
$region0: #{tpu_custom_call.1}
  #allocation0 [shape = 'u32[]', space=smem, size = 0x4, offset = 0x4, fixed_abs, tag = 'smem constant byte address 0x4 - core index']
  #allocation1 [shape = 'u32[144,128]{1,0:T(1,128)}', space=vmem, size = 0x12000, scoped, tag = 'internal scratch']
  %s0 = inlined_call_operand.vmem [shape: bf16[32,512], index: 0, kind: input, shape index: {}]
  %s1 = inlined_call_operand.vmem [shape: bf16[32,32], index: 1, kind: input, shape index: {}]
  %s2 = inlined_call_operand.vmem [shape: f32[32,1], index: 2, kind: input, shape index: {}]
  %s3 = inlined_call_operand.vmem [shape: f32[32,1], index: 3, kind: input, shape index: {}]
  %s4 = inlined_call_operand.vmem [shape: f32[32,1], index: 4, kind: input, shape index: {}]
  %s5 = inlined_call_operand.vmem [shape: bf16[32,32], index: 5, kind: input, shape index: {}]
  %s6 = inlined_call_operand.vmem [shape: f32[32,1], index: 6, kind: input, shape index: {}]
  %s7 = inlined_call_operand.vmem [shape: f32[32,1], index: 7, kind: input, shape index: {}]
  %s8 = inlined_call_operand.vmem [shape: f32[32,1], index: 8, kind: input, shape index: {}]
  %s9 = inlined_call_operand.vmem [shape: bf16[16,32], index: 9, kind: input, shape index: {}]
  %s10 = inlined_call_operand.vmem [shape: f32[16,1], index: 10, kind: input, shape index: {}]
  %s11 = inlined_call_operand.hbm [shape: f32[16,512], index: 11, kind: output, shape index: {}]
  %s12 = sld [smem:[#allocation0]]
  $region115: #{tpu_custom_call.1} parent=0
    _
  %s14 = ssub.s32 1, %s12
  %s15 = scalar_select 0, %s14, %s12
  $region1: #{tpu_custom_call.1} parent=0
    #allocation2 [shape = 'u8[32768]{0}', space=vmem, size = 0x8000, scoped, tag = 'input window, operand 0']
    #allocation3 [shape = 'u8[32768]{0}', space=vmem, size = 0x8000, scoped, tag = 'output window, operand 0']
    #allocation4 [shape = 's32[2]{0}', space=sflag, size = 0x8, scoped, tag = 'scoped memory for tpu_custom_call.1']
    %16 = vsyncpa [#allocation4], 0
    %s17 = scalar_lea.sflag [#allocation4], 1
    %18 = vsyncpa %s17, 0
    loop: start=0, step=1, limit=4
    $region2: #{tpu_custom_call.1} parent=1 // loop_pre_header
      _
    $region3: #{tpu_custom_call.1} parent=1 // loop_header
      %s20 = sphi 0, %s24
      %p21 = scmp.ge.s32.totalorder %s20, 4
      %s30 = sphi 0, %s32
      %s33 = sphi 0, %s30
      %s34 = sphi 0, %s33
      %s50 = sphi 0, %s34
      %s54 = sphi 0, %s54
      %s56 = sphi 0, %s54
      %s57 = sphi 0, %s56
      %s71 = sphi 0, %s57
      %s75 = sphi 0, %s75
      %s77 = sphi 0, %s75
      %s78 = sphi 0, %s77
      %s92 = sphi 0, %s78
      %s96 = sphi 0, %s96
      %s98 = sphi 0, %s96
      %s99 = sphi 0, %s98
      %s113 = sphi 0, %s99
      %s117 = sphi 0, %s117
      %s119 = sphi 0, %s117
      %s120 = sphi 0, %s119
      %s134 = sphi 0, %s120
      %s138 = sphi 0, %s138
      %s140 = sphi 0, %s138
      %s141 = sphi 0, %s140
      %s155 = sphi 0, %s141
      %s159 = sphi 0, %s159
      %s161 = sphi 0, %s159
      %s162 = sphi 0, %s161
      %s176 = sphi 0, %s162
      %s180 = sphi 0, %s180
      %s182 = sphi 0, %s180
      %s183 = sphi 0, %s182
      %s197 = sphi 0, %s183
      %s201 = sphi 0, %s201
      %s203 = sphi 0, %s201
      %s204 = sphi 0, %s203
      %s218 = sphi 0, %s204
      %s222 = sphi 0, %s222
      %s224 = sphi 0, %s222
      %s225 = sphi 0, %s224
      %s239 = sphi 0, %s225
      %s243 = sphi 0, %s243
      %s245 = sphi 0, %s243
      %s246 = sphi 0, %s245
      %s260 = sphi 0, %s246
      %s266 = sphi 0, %s268
      %s269 = sphi 0, %s266
      %s270 = sphi 0, %s269
      %s286 = sphi 0, %s270
    $region4: #{tpu_custom_call.1} parent=1 // loop_header_branch
      %23 = sbr.rel (%p21) target = $region8
    $region5: #{tpu_custom_call.1} parent=1 // loop_body
      %s25 = ssub.s32 %s20, 1
      %s26 = ssub.s32 %s20, 2
      %s27 = sadd.s32 %s20, 1
      %s28 = ssub.s32 %s20, %s27
      %p29 = scmp.eq.s32.totalorder %s28, 0
      %s31 = sadd.s32 %s30, 1
      %s32 = scalar_select %p29, %s30, %s31
      %p35 = pneg %p29
      %p36 = scmp.eq.s32.totalorder %s20, 1
      %p37 = por %p35, %p36
      %p38 = scmp.ne.s32.totalorder %s30, %s33
      %p39 = scmp.eq.s32.totalorder %s20, 0
      %p40 = por %p38, %p39
      %p41 = scmp.ne.s32.totalorder %s30, %s33
      %p42 = scmp.eq.s32.totalorder %s25, 1
      %p43 = por %p41, %p42
      %p44 = scmp.ne.s32.totalorder %s33, %s34
      %p45 = scmp.eq.s32.totalorder %s25, 0
      %p46 = por %p44, %p45
      %p47 = scmp.ne.s32.totalorder %s33, %s34
      %p48 = scmp.eq.s32.totalorder %s26, 1
      %p49 = por %p47, %p48
      %p51 = scmp.ne.s32.totalorder %s34, %s50
      %p52 = scmp.eq.s32.totalorder %s26, 0
      %p53 = por %p51, %p52
      %s55 = sadd.s32 %s54, 1
      %p58 = scmp.eq.s32.totalorder %s20, 1
      %p59 = scmp.ne.s32.totalorder %s54, %s56
      %p60 = scmp.eq.s32.totalorder %s20, 0
      %p61 = por %p59, %p60
      %p62 = scmp.ne.s32.totalorder %s54, %s56
      %p63 = scmp.eq.s32.totalorder %s25, 1
      %p64 = por %p62, %p63
      %p65 = scmp.ne.s32.totalorder %s56, %s57
      %p66 = scmp.eq.s32.totalorder %s25, 0
      %p67 = por %p65, %p66
      %p68 = scmp.ne.s32.totalorder %s56, %s57
      %p69 = scmp.eq.s32.totalorder %s26, 1
      %p70 = por %p68, %p69
      %p72 = scmp.ne.s32.totalorder %s57, %s71
      %p73 = scmp.eq.s32.totalorder %s26, 0
      %p74 = por %p72, %p73
      %s76 = sadd.s32 %s75, 1
      %p79 = scmp.eq.s32.totalorder %s20, 1
      %p80 = scmp.ne.s32.totalorder %s75, %s77
      %p81 = scmp.eq.s32.totalorder %s20, 0
      %p82 = por %p80, %p81
      %p83 = scmp.ne.s32.totalorder %s75, %s77
      %p84 = scmp.eq.s32.totalorder %s25, 1
      %p85 = por %p83, %p84
      %p86 = scmp.ne.s32.totalorder %s77, %s78
      %p87 = scmp.eq.s32.totalorder %s25, 0
      %p88 = por %p86, %p87
      %p89 = scmp.ne.s32.totalorder %s77, %s78
      %p90 = scmp.eq.s32.totalorder %s26, 1
      %p91 = por %p89, %p90
      %p93 = scmp.ne.s32.totalorder %s78, %s92
      %p94 = scmp.eq.s32.totalorder %s26, 0
      %p95 = por %p93, %p94
      %s97 = sadd.s32 %s96, 1
      %p100 = scmp.eq.s32.totalorder %s20, 1
      %p101 = scmp.ne.s32.totalorder %s96, %s98
      %p102 = scmp.eq.s32.totalorder %s20, 0
      %p103 = por %p101, %p102
      %p104 = scmp.ne.s32.totalorder %s96, %s98
      %p105 = scmp.eq.s32.totalorder %s25, 1
      %p106 = por %p104, %p105
      %p107 = scmp.ne.s32.totalorder %s98, %s99
      %p108 = scmp.eq.s32.totalorder %s25, 0
      %p109 = por %p107, %p108
      %p110 = scmp.ne.s32.totalorder %s98, %s99
      %p111 = scmp.eq.s32.totalorder %s26, 1
      %p112 = por %p110, %p111
      %p114 = scmp.ne.s32.totalorder %s99, %s113
      %p115 = scmp.eq.s32.totalorder %s26, 0
      %p116 = por %p114, %p115
      %s118 = sadd.s32 %s117, 1
      %p121 = scmp.eq.s32.totalorder %s20, 1
      %p122 = scmp.ne.s32.totalorder %s117, %s119
      %p123 = scmp.eq.s32.totalorder %s20, 0
      %p124 = por %p122, %p123
      %p125 = scmp.ne.s32.totalorder %s117, %s119
      %p126 = scmp.eq.s32.totalorder %s25, 1
      %p127 = por %p125, %p126
      %p128 = scmp.ne.s32.totalorder %s119, %s120
      %p129 = scmp.eq.s32.totalorder %s25, 0
      %p130 = por %p128, %p129
      %p131 = scmp.ne.s32.totalorder %s119, %s120
      %p132 = scmp.eq.s32.totalorder %s26, 1
      %p133 = por %p131, %p132
      %p135 = scmp.ne.s32.totalorder %s120, %s134
      %p136 = scmp.eq.s32.totalorder %s26, 0
      %p137 = por %p135, %p136
      %s139 = sadd.s32 %s138, 1
      %p142 = scmp.eq.s32.totalorder %s20, 1
      %p143 = scmp.ne.s32.totalorder %s138, %s140
      %p144 = scmp.eq.s32.totalorder %s20, 0
      %p145 = por %p143, %p144
      %p146 = scmp.ne.s32.totalorder %s138, %s140
      %p147 = scmp.eq.s32.totalorder %s25, 1
      %p148 = por %p146, %p147
      %p149 = scmp.ne.s32.totalorder %s140, %s141
      %p150 = scmp.eq.s32.totalorder %s25, 0
      %p151 = por %p149, %p150
      %p152 = scmp.ne.s32.totalorder %s140, %s141
      %p153 = scmp.eq.s32.totalorder %s26, 1
      %p154 = por %p152, %p153
      %p156 = scmp.ne.s32.totalorder %s141, %s155
      %p157 = scmp.eq.s32.totalorder %s26, 0
      %p158 = por %p156, %p157
      %s160 = sadd.s32 %s159, 1
      %p163 = scmp.eq.s32.totalorder %s20, 1
      %p164 = scmp.ne.s32.totalorder %s159, %s161
      %p165 = scmp.eq.s32.totalorder %s20, 0
      %p166 = por %p164, %p165
      %p167 = scmp.ne.s32.totalorder %s159, %s161
      %p168 = scmp.eq.s32.totalorder %s25, 1
      %p169 = por %p167, %p168
      %p170 = scmp.ne.s32.totalorder %s161, %s162
      %p171 = scmp.eq.s32.totalorder %s25, 0
      %p172 = por %p170, %p171
      %p173 = scmp.ne.s32.totalorder %s161, %s162
      %p174 = scmp.eq.s32.totalorder %s26, 1
      %p175 = por %p173, %p174
      %p177 = scmp.ne.s32.totalorder %s162, %s176
      %p178 = scmp.eq.s32.totalorder %s26, 0
      %p179 = por %p177, %p178
      %s181 = sadd.s32 %s180, 1
      %p184 = scmp.eq.s32.totalorder %s20, 1
      %p185 = scmp.ne.s32.totalorder %s180, %s182
      %p186 = scmp.eq.s32.totalorder %s20, 0
      %p187 = por %p185, %p186
      %p188 = scmp.ne.s32.totalorder %s180, %s182
      %p189 = scmp.eq.s32.totalorder %s25, 1
      %p190 = por %p188, %p189
      %p191 = scmp.ne.s32.totalorder %s182, %s183
      %p192 = scmp.eq.s32.totalorder %s25, 0
      %p193 = por %p191, %p192
      %p194 = scmp.ne.s32.totalorder %s182, %s183
      %p195 = scmp.eq.s32.totalorder %s26, 1
      %p196 = por %p194, %p195
      %p198 = scmp.ne.s32.totalorder %s183, %s197
      %p199 = scmp.eq.s32.totalorder %s26, 0
      %p200 = por %p198, %p199
      %s202 = sadd.s32 %s201, 1
      %p205 = scmp.eq.s32.totalorder %s20, 1
      %p206 = scmp.ne.s32.totalorder %s201, %s203
      %p207 = scmp.eq.s32.totalorder %s20, 0
      %p208 = por %p206, %p207
      %p209 = scmp.ne.s32.totalorder %s201, %s203
      %p210 = scmp.eq.s32.totalorder %s25, 1
      %p211 = por %p209, %p210
      %p212 = scmp.ne.s32.totalorder %s203, %s204
      %p213 = scmp.eq.s32.totalorder %s25, 0
      %p214 = por %p212, %p213
      %p215 = scmp.ne.s32.totalorder %s203, %s204
      %p216 = scmp.eq.s32.totalorder %s26, 1
      %p217 = por %p215, %p216
      %p219 = scmp.ne.s32.totalorder %s204, %s218
      %p220 = scmp.eq.s32.totalorder %s26, 0
      %p221 = por %p219, %p220
      %s223 = sadd.s32 %s222, 1
      %p226 = scmp.eq.s32.totalorder %s20, 1
      %p227 = scmp.ne.s32.totalorder %s222, %s224
      %p228 = scmp.eq.s32.totalorder %s20, 0
      %p229 = por %p227, %p228
      %p230 = scmp.ne.s32.totalorder %s222, %s224
      %p231 = scmp.eq.s32.totalorder %s25, 1
      %p232 = por %p230, %p231
      %p233 = scmp.ne.s32.totalorder %s224, %s225
      %p234 = scmp.eq.s32.totalorder %s25, 0
      %p235 = por %p233, %p234
      %p236 = scmp.ne.s32.totalorder %s224, %s225
      %p237 = scmp.eq.s32.totalorder %s26, 1
      %p238 = por %p236, %p237
      %p240 = scmp.ne.s32.totalorder %s225, %s239
      %p241 = scmp.eq.s32.totalorder %s26, 0
      %p242 = por %p240, %p241
      %s244 = sadd.s32 %s243, 1
      %p247 = scmp.eq.s32.totalorder %s20, 1
      %p248 = scmp.ne.s32.totalorder %s243, %s245
      %p249 = scmp.eq.s32.totalorder %s20, 0
      %p250 = por %p248, %p249
      %p251 = scmp.ne.s32.totalorder %s243, %s245
      %p252 = scmp.eq.s32.totalorder %s25, 1
      %p253 = por %p251, %p252
      %p254 = scmp.ne.s32.totalorder %s245, %s246
      %p255 = scmp.eq.s32.totalorder %s25, 0
      %p256 = por %p254, %p255
      %p257 = scmp.ne.s32.totalorder %s245, %s246
      %p258 = scmp.eq.s32.totalorder %s26, 1
      %p259 = por %p257, %p258
      %p261 = scmp.ne.s32.totalorder %s246, %s260
      %p262 = scmp.eq.s32.totalorder %s26, 0
      %p263 = por %p261, %p262
      %s264 = ssub.s32 %s20, %s27
      %p265 = scmp.eq.s32.totalorder %s264, 0
      %s267 = sadd.s32 %s266, 1
      %s268 = scalar_select %p265, %s266, %s267
      %p271 = pneg %p265
      %p272 = scmp.eq.s32.totalorder %s20, 1
      %p273 = por %p271, %p272
      %p274 = scmp.ne.s32.totalorder %s266, %s269
      %p275 = scmp.eq.s32.totalorder %s20, 0
      %p276 = por %p274, %p275
      %p277 = scmp.ne.s32.totalorder %s266, %s269
      %p278 = scmp.eq.s32.totalorder %s25, 1
      %p279 = por %p277, %p278
      %p280 = scmp.ne.s32.totalorder %s269, %s270
      %p281 = scmp.eq.s32.totalorder %s25, 0
      %p282 = por %p280, %p281
      %p283 = scmp.ne.s32.totalorder %s269, %s270
      %p284 = scmp.eq.s32.totalorder %s26, 1
      %p285 = por %p283, %p284
      %p287 = scmp.ne.s32.totalorder %s270, %s286
      %p288 = scmp.eq.s32.totalorder %s26, 0
      %p289 = por %p287, %p288
      %p290 = scmp.le.s32.totalorder 1, %s20
      %p291 = scmp.lt.s32.totalorder %s20, 3
      %p292 = pnand %p290, %p291
      %p293 = pneg %p292
      // Predicated region
      $region9: #{tpu_custom_call.1} parent=5 // pred_check
        _
      $region10: #{tpu_custom_call.1} parent=5 // pred_check_branch
        %295 = sbr.rel (%p292) target = $region12
      $region11: #{tpu_custom_call.1} parent=5 // pred_region
        %s296 = ssub.s32 %s20, 1
        // Predicated region
        $region13: #{tpu_custom_call.1} parent=11 // pred_check
          %p297 = pneg %p67
        $region14: #{tpu_custom_call.1} parent=11 // pred_check_branch
          %299 = sbr.rel (%p297) target = $region16
        $region15: #{tpu_custom_call.1} parent=11 // pred_region
          _
        $region16: #{tpu_custom_call.1} parent=11 // pred_fallthru
          _
        // Predicated region
        $region17: #{tpu_custom_call.1} parent=11 // pred_check
          %p300 = pneg %p88
        $region18: #{tpu_custom_call.1} parent=11 // pred_check_branch
          %302 = sbr.rel (%p300) target = $region20
        $region19: #{tpu_custom_call.1} parent=11 // pred_region
          _
        $region20: #{tpu_custom_call.1} parent=11 // pred_fallthru
          _
        // Predicated region
        $region21: #{tpu_custom_call.1} parent=11 // pred_check
          %p303 = pneg %p109
        $region22: #{tpu_custom_call.1} parent=11 // pred_check_branch
          %305 = sbr.rel (%p303) target = $region24
        $region23: #{tpu_custom_call.1} parent=11 // pred_region
          _
        $region24: #{tpu_custom_call.1} parent=11 // pred_fallthru
          _
        // Predicated region
        $region25: #{tpu_custom_call.1} parent=11 // pred_check
          %p306 = pneg %p130
        $region26: #{tpu_custom_call.1} parent=11 // pred_check_branch
          %308 = sbr.rel (%p306) target = $region28
        $region27: #{tpu_custom_call.1} parent=11 // pred_region
          _
        $region28: #{tpu_custom_call.1} parent=11 // pred_fallthru
          _
        // Predicated region
        $region29: #{tpu_custom_call.1} parent=11 // pred_check
          %p309 = pneg %p151
        $region30: #{tpu_custom_call.1} parent=11 // pred_check_branch
          %311 = sbr.rel (%p309) target = $region32
        $region31: #{tpu_custom_call.1} parent=11 // pred_region
          _
        $region32: #{tpu_custom_call.1} parent=11 // pred_fallthru
          _
        // Predicated region
        $region33: #{tpu_custom_call.1} parent=11 // pred_check
          %p312 = pneg %p172
        $region34: #{tpu_custom_call.1} parent=11 // pred_check_branch
          %314 = sbr.rel (%p312) target = $region36
        $region35: #{tpu_custom_call.1} parent=11 // pred_region
          _
        $region36: #{tpu_custom_call.1} parent=11 // pred_fallthru
          _
        // Predicated region
        $region37: #{tpu_custom_call.1} parent=11 // pred_check
          %p315 = pneg %p193
        $region38: #{tpu_custom_call.1} parent=11 // pred_check_branch
          %317 = sbr.rel (%p315) target = $region40
        $region39: #{tpu_custom_call.1} parent=11 // pred_region
          _
        $region40: #{tpu_custom_call.1} parent=11 // pred_fallthru
          _
        // Predicated region
        $region41: #{tpu_custom_call.1} parent=11 // pred_check
          %p318 = pneg %p214
        $region42: #{tpu_custom_call.1} parent=11 // pred_check_branch
          %320 = sbr.rel (%p318) target = $region44
        $region43: #{tpu_custom_call.1} parent=11 // pred_region
          _
        $region44: #{tpu_custom_call.1} parent=11 // pred_fallthru
          _
        // Predicated region
        $region45: #{tpu_custom_call.1} parent=11 // pred_check
          %p321 = pneg %p235
        $region46: #{tpu_custom_call.1} parent=11 // pred_check_branch
          %323 = sbr.rel (%p321) target = $region48
        $region47: #{tpu_custom_call.1} parent=11 // pred_region
          _
        $region48: #{tpu_custom_call.1} parent=11 // pred_fallthru
          _
        // Predicated region
        $region49: #{tpu_custom_call.1} parent=11 // pred_check
          %p324 = pneg %p256
        $region50: #{tpu_custom_call.1} parent=11 // pred_check_branch
          %326 = sbr.rel (%p324) target = $region52
        $region51: #{tpu_custom_call.1} parent=11 // pred_region
          _
        $region52: #{tpu_custom_call.1} parent=11 // pred_fallthru
          _
      $region12: #{tpu_custom_call.1} parent=5 // pred_fallthru
        _
      %p327 = scmp.lt.s32.totalorder %s20, 2
      // Predicated region
      $region53: #{tpu_custom_call.1} parent=5 // pred_check
        %p328 = pneg %p327
      $region54: #{tpu_custom_call.1} parent=5 // pred_check_branch
        %330 = sbr.rel (%p328) target = $region56
      $region55: #{tpu_custom_call.1} parent=5 // pred_region
        // Predicated region
        $region57: #{tpu_custom_call.1} parent=55 // pred_check
          %p331 = pneg %p40
        $region58: #{tpu_custom_call.1} parent=55 // pred_check_branch
          %333 = sbr.rel (%p331) target = $region60
        $region59: #{tpu_custom_call.1} parent=55 // pred_region
          %s334 = sand.u32 %s30, 1
          %s335 = sand.u32 %s30, 1
          %s336 = smul.addr %s335, 32
          %s337 = scalar_lea.vmem [#allocation2], %s336
          %s338 = smul.u32 2, %s20
          %s339 = smul.addr %s338, 4
          %s340 = scalar_lea.vmem %s0, %s339
          // Predicated region
          $region61: #{tpu_custom_call.1} parent=59 // pred_check
            _
          $region62: #{tpu_custom_call.1} parent=59 // pred_check_branch
            %342 = sbr.rel (0) target = $region64
          $region63: #{tpu_custom_call.1} parent=59 // pred_region
            // Predicated region
            $region65: #{tpu_custom_call.1} parent=63 // pred_check
              _
            $region66: #{tpu_custom_call.1} parent=63 // pred_check_branch
              %344 = sbr.rel (0) target = $region68
            $region67: #{tpu_custom_call.1} parent=63 // pred_region
              // Predicated region
              $region80: #{tpu_custom_call.1} parent=67 // pred_check
                _
              $region81: #{tpu_custom_call.1} parent=67 // pred_check_branch
                %365 = sbr.rel (0) target = $region83
              $region82: #{tpu_custom_call.1} parent=67 // pred_region
                loop: start=0, step=1, limit=1
                $region84: #{tpu_custom_call.1} parent=82 // loop_pre_header
                  _
                $region85: #{tpu_custom_call.1} parent=82 // loop_header
                  %s367 = sphi 0, %s371
                  %p368 = scmp.ge.s32.totalorder %s367, 1
                  %s372 = sphi %s340, %s340
                  %s373 = sphi %s337, %s337
                $region86: #{tpu_custom_call.1} parent=82 // loop_header_branch
                  %370 = sbr.rel (%p368) target = $region90
                $region87: #{tpu_custom_call.1} parent=82 // loop_body
                  %v374 = vld [vmem:[%s372] sm:$0xff]
                  %375 = vst [vmem:[%s373] sm:$0xff] %v374
                  %v376 = vld [vmem:[%s372 + $0x10] sm:$0xff]
                  %377 = vst [vmem:[%s373 + $0x8] sm:$0xff] %v376
                  %v378 = vld [vmem:[%s372 + $0x20] sm:$0xff]
                  %379 = vst [vmem:[%s373 + $0x10] sm:$0xff] %v378
                  %v380 = vld [vmem:[%s372 + $0x30] sm:$0xff]
                  %381 = vst [vmem:[%s373 + $0x18] sm:$0xff] %v380
                $region88: #{tpu_custom_call.1} parent=82 // loop_footer
                  %s371 = sadd.s32 1, %s367
                $region89: #{tpu_custom_call.1} parent=82 // loop_footer_branch
                  %366 = sbr.rel target = $region85
                $region90: #{tpu_custom_call.1} parent=82 // loop_exit
                  _
              $region83: #{tpu_custom_call.1} parent=67 // pred_fallthru
                _
              // Predicated region
              $region91: #{tpu_custom_call.1} parent=67 // pred_check
                _
              $region92: #{tpu_custom_call.1} parent=67 // pred_check_branch
                %383 = sbr.rel target = $region94
              $region93: #{tpu_custom_call.1} parent=67 // pred_region
                _
              $region94: #{tpu_custom_call.1} parent=67 // pred_fallthru
                _
            $region68: #{tpu_custom_call.1} parent=63 // pred_fallthru
              _
            // Predicated region
            $region69: #{tpu_custom_call.1} parent=63 // pred_check
              _
            $region70: #{tpu_custom_call.1} parent=63 // pred_check_branch
              %346 = sbr.rel target = $region72
            $region71: #{tpu_custom_call.1} parent=63 // pred_region
              loop: start=0, step=1, limit=1
              $region73: #{tpu_custom_call.1} parent=71 // loop_pre_header
                _
              $region74: #{tpu_custom_call.1} parent=71 // loop_header
                %s349 = sphi 0, %s353
                %p350 = scmp.ge.s32.totalorder %s349, 1
                %s354 = sphi %s340, %s340
                %s355 = sphi %s337, %s337
              $region75: #{tpu_custom_call.1} parent=71 // loop_header_branch
                %352 = sbr.rel (%p350) target = $region79
              $region76: #{tpu_custom_call.1} parent=71 // loop_body
                %v356 = vld [vmem:[%s354] sm:$0xff]
                %357 = vst [vmem:[%s355] sm:$0xff] %v356
                %v358 = vld [vmem:[%s354 + $0x10] sm:$0xff]
                %359 = vst [vmem:[%s355 + $0x8] sm:$0xff] %v358
                %v360 = vld [vmem:[%s354 + $0x20] sm:$0xff]
                %361 = vst [vmem:[%s355 + $0x10] sm:$0xff] %v360
                %v362 = vld [vmem:[%s354 + $0x30] sm:$0xff]
                %363 = vst [vmem:[%s355 + $0x18] sm:$0xff] %v362
              $region77: #{tpu_custom_call.1} parent=71 // loop_footer
                %s353 = sadd.s32 1, %s349
              $region78: #{tpu_custom_call.1} parent=71 // loop_footer_branch
                %348 = sbr.rel target = $region74
              $region79: #{tpu_custom_call.1} parent=71 // loop_exit
                _
            $region72: #{tpu_custom_call.1} parent=63 // pred_fallthru
              _
          $region64: #{tpu_custom_call.1} parent=59 // pred_fallthru
            _
          %384 = vnop
        $region60: #{tpu_custom_call.1} parent=55 // pred_fallthru
          _
      $region56: #{tpu_custom_call.1} parent=5 // pred_fallthru
        _
      %p385 = scmp.le.s32.totalorder 1, %s20
      %p386 = scmp.lt.s32.totalorder %s20, 3
      %p387 = pnand %p385, %p386
      %p388 = pneg %p387
      // Predicated region
      $region95: #{tpu_custom_call.1} parent=5 // pred_check
        _
      $region96: #{tpu_custom_call.1} parent=5 // pred_check_branch
        %390 = sbr.rel (%p387) target = $region98
      $region97: #{tpu_custom_call.1} parent=5 // pred_region
        %s391 = ssub.s32 %s20, 1
        %s392 = sand.u32 %s33, 1
        %s393 = sand.u32 %s33, 1
        %s394 = smul.addr %s393, 32
        %s395 = scalar_lea.vmem [#allocation2], %s394
        // Predicated region
        $region99: #{tpu_custom_call.1} parent=97 // pred_check
          %p396 = pneg %p46
        $region100: #{tpu_custom_call.1} parent=97 // pred_check_branch
          %398 = sbr.rel (%p396) target = $region102
        $region101: #{tpu_custom_call.1} parent=97 // pred_region
          _
        $region102: #{tpu_custom_call.1} parent=97 // pred_fallthru
          _
        %s399 = sand.u32 %s33, 1
        %s400 = sand.u32 %s33, 1
        %s401 = smul.addr %s400, 32
        %s402 = scalar_lea.vmem [#allocation2], %s401
        %p403 = pneg %p46
        %p404 = pneg %p43
        %p405 = pneg %p67
        %p406 = pneg %p64
        %p407 = pneg %p88
        %p408 = pneg %p85
        %p409 = pneg %p109
        %p410 = pneg %p106
        %p411 = pneg %p130
        %p412 = pneg %p127
        %p413 = pneg %p151
        %p414 = pneg %p148
        %p415 = pneg %p172
        %p416 = pneg %p169
        %p417 = pneg %p193
        %p418 = pneg %p190
        %p419 = pneg %p214
        %p420 = pneg %p211
        %p421 = pneg %p235
        %p422 = pneg %p232
        %p423 = pneg %p256
        %p424 = pneg %p253
        %p425 = pneg %p282
        %p426 = pneg %p279
        %s427 = sand.u32 %s269, 1
        %s428 = scalar_lea.sflag [#allocation4], %s427
        %s429 = sand.u32 %s269, 1
        %s430 = smul.addr %s429, 32
        %s431 = scalar_lea.vmem [#allocation3], %s430
        %s432 = smul.u32 2, %s25
        %s433 = smul.u32 2, %s25
        %v435 = vld [vmem:[%s395] sm:$0xff]
        %v436 = vld [vmem:[%s395 + $0x8] sm:$0xff]
        %v437 = vld [vmem:[%s395 + $0x10] sm:$0xff]
        %v438 = vld [vmem:[%s395 + $0x18] sm:$0xff]
        %v439 = vld [vmem:[%s1] sm:$0xf]
        %v440 = vld [vmem:[%s1 + $0x4] sm:$0xf]
        %v441 = vld [vmem:[%s1 + $0x8] sm:$0xf]
        %v442 = vld [vmem:[%s1 + $0xc] sm:$0xf]
        %v443 = vld [vmem:[%s2] sm:$0xff]
        %v444 = vld [vmem:[%s2 + $0x8] sm:$0xff]
        %v445 = vld [vmem:[%s2 + $0x10] sm:$0xff]
        %v446 = vld [vmem:[%s2 + $0x18] sm:$0xff]
        %448 = vset.pattern.permute.xlu0 0
        %449 = vperm.xlu0 %448, %v443
        %v450 = vpop.permute.xlu0 %449
        %453 = vset.pattern.permute.xlu0 0
        %454 = vperm.xlu0 %453, %v444
        %v455 = vpop.permute.xlu0 %454
        %458 = vset.pattern.permute.xlu0 0
        %459 = vperm.xlu0 %458, %v445
        %v460 = vpop.permute.xlu0 %459
        %463 = vset.pattern.permute.xlu0 0
        %464 = vperm.xlu0 %463, %v446
        %v465 = vpop.permute.xlu0 %464
        %v471 = vunpack.c.l.b16 %v439
        %v472 = vunpack.c.l.b16 %v440
        %v473 = vunpack.c.l.b16 %v441
        %v474 = vunpack.c.l.b16 %v442
        %v475 = vpack.c.b16 %v472, %v471
        %v476 = vpack.c.b16 %v474, %v473
        %v481 = vunpack.c.l.b16 %v435
        %v482 = vunpack.c.h.b16 %v435
        %v483 = vunpack.c.l.b16 %v436
        %v484 = vunpack.c.h.b16 %v436
        %v485 = vunpack.c.l.b16 %v437
        %v486 = vunpack.c.h.b16 %v437
        %v487 = vunpack.c.l.b16 %v438
        %v488 = vunpack.c.h.b16 %v438
        %v489 = vpack.c.b16 %v483, %v481
        %v490 = vpack.c.b16 %v484, %v482
        %v491 = vpack.c.b16 %v487, %v485
        %v492 = vpack.c.b16 %v488, %v486
        %vm497 = vcmask 261120
        %v499 = vsel %vm497, %v475, 0
        %v502 = vsel %vm497, %v476, 0
        %504 = vmatprep.subr.bf16.mxu0 %v490
        %505 = vmatpush1.bf16.msra.mxu0 %v489
        %506 = vmatprep.subr.bf16.mxu0 %v492
        %507 = vmatpush1.bf16.msra.mxu0 %v491
        %508 = vmatprep.subr.bf16.mxu0 0
        %509 = vmatpush1.bf16.msra.mxu0 0
        %510 = vmatprep.subr.bf16.mxu0 0
        %511 = vmatpush1.bf16.msra.mxu0 0
        %512 = vmatprep.subr.bf16.mxu0 0
        %513 = vmatpush1.bf16.msra.mxu0 0
        %514 = vmatprep.subr.bf16.mxu0 0
        %515 = vmatpush1.bf16.msra.mxu0 0
        %516 = vmatprep.subr.bf16.mxu0 0
        %517 = vmatpush1.bf16.msra.mxu0 0
        %518 = vmatprep.subr.bf16.mxu0 0
        %519 = vmatpush1.bf16.msra.mxu0 0
        %520 = vmatprep.subr.bf16.mxu0 0
        %521 = vmatpush1.bf16.msra.mxu0 0
        %522 = vmatprep.subr.bf16.mxu0 0
        %523 = vmatpush1.bf16.msra.mxu0 0
        %524 = vmatprep.subr.bf16.mxu0 0
        %525 = vmatpush1.bf16.msra.mxu0 0
        %526 = vmatprep.subr.bf16.mxu0 0
        %527 = vmatpush1.bf16.msra.mxu0 0
        %528 = vmatprep.subr.bf16.mxu0 0
        %529 = vmatpush1.bf16.msra.mxu0 0
        %530 = vmatprep.subr.bf16.mxu0 0
        %531 = vmatpush1.bf16.msra.mxu0 0
        %532 = vmatprep.subr.bf16.mxu0 0
        %533 = vmatpush1.bf16.msra.mxu0 0
        %534 = vmatprep.subr.bf16.mxu0 0
        %535 = vmatpush1.bf16.msra.mxu0 0
        %536 = vmatprep.mubr.bf16.mxu0 0
        %537 = vmatmul.mubr.bf16.gmra.mrb[0].mxu0 %v499
        %v538 = vpop.f32.mrb[0].mxu0
        %v539 = vadd.f32 %v450, %v538
        %v540 = vpop.f32.mrb[0].mxu0
        %v541 = vadd.f32 %v450, %v540
        %v542 = vpop.f32.mrb[0].mxu0
        %v543 = vadd.f32 %v455, %v542
        %v544 = vpop.f32.mrb[0].mxu0
        %v545 = vadd.f32 %v455, %v544
        %546 = vmatprep.mubr.bf16.mxu0 0
        %547 = vmatmul.mubr.bf16.gmra.mrb[0].mxu0 %v502
        %v548 = vpop.f32.mrb[0].mxu0
        %v549 = vadd.f32 %v460, %v548
        %v550 = vpop.f32.mrb[0].mxu0
        %v551 = vadd.f32 %v460, %v550
        %v552 = vpop.f32.mrb[0].mxu0
        %v553 = vadd.f32 %v465, %v552
        %v554 = vpop.f32.mrb[0].mxu0
        %v555 = vadd.f32 %v465, %v554
        %556 = vdwg.mxu0
        %v557 = vmax.f32 %v539, 0.0
        %v558 = vmax.f32 %v541, 0.0
        %v559 = vmax.f32 %v543, 0.0
        %v560 = vmax.f32 %v545, 0.0
        %v561 = vmax.f32 %v549, 0.0
        %v562 = vmax.f32 %v551, 0.0
        %v563 = vmax.f32 %v553, 0.0
        %v564 = vmax.f32 %v555, 0.0
        %v565 = vld [vmem:[%s3] sm:$0xff]
        %v566 = vld [vmem:[%s3 + $0x8] sm:$0xff]
        %v567 = vld [vmem:[%s3 + $0x10] sm:$0xff]
        %v568 = vld [vmem:[%s3 + $0x18] sm:$0xff]
        %v569 = vld [vmem:[%s4] sm:$0xff]
        %v570 = vld [vmem:[%s4 + $0x8] sm:$0xff]
        %v571 = vld [vmem:[%s4 + $0x10] sm:$0xff]
        %v572 = vld [vmem:[%s4 + $0x18] sm:$0xff]
        %v573 = vadd.f32 %v557, %v559
        %v574 = vadd.f32 %v573, %v561
        %v575 = vadd.f32 %v574, %v563
        %v576 = vrot.slane %v575, 4
        %v577 = vadd.f32 %v575, %v576
        %v578 = vrot.slane %v577, 2
        %v579 = vadd.f32 %v577, %v578
        %v580 = vrot.slane %v579, 1
        %v581 = vadd.f32 %v579, %v580
        %v582 = vadd.f32 %v558, %v560
        %v583 = vadd.f32 %v582, %v562
        %v584 = vadd.f32 %v583, %v564
        %v585 = vrot.slane %v584, 4
        %v586 = vadd.f32 %v584, %v585
        %v587 = vrot.slane %v586, 2
        %v588 = vadd.f32 %v586, %v587
        %v589 = vrot.slane %v588, 1
        %v590 = vadd.f32 %v588, %v589
        %v591 = vrcp.pop 32.0
        %v592 = vmul.f32 %v581, %v591
        %v593 = vmul.f32 %v590, %v591
        %v594 = vsub.f32 %v557, %v592
        %v595 = vsub.f32 %v558, %v593
        %v596 = vsub.f32 %v559, %v592
        %v597 = vsub.f32 %v560, %v593
        %v598 = vsub.f32 %v561, %v592
        %v599 = vsub.f32 %v562, %v593
        %v600 = vsub.f32 %v563, %v592
        %v601 = vsub.f32 %v564, %v593
        %v602 = vmul.f32 %v594, %v594
        %v603 = vmul.f32 %v595, %v595
        %v604 = vmul.f32 %v596, %v596
        %v605 = vmul.f32 %v597, %v597
        %v606 = vmul.f32 %v598, %v598
        %v607 = vmul.f32 %v599, %v599
        %v608 = vmul.f32 %v600, %v600
        %v609 = vmul.f32 %v601, %v601
        %v610 = vadd.f32 %v602, %v604
        %v611 = vadd.f32 %v610, %v606
        %v612 = vadd.f32 %v611, %v608
        %v613 = vrot.slane %v612, 4
        %v614 = vadd.f32 %v612, %v613
        %v615 = vrot.slane %v614, 2
        %v616 = vadd.f32 %v614, %v615
        %v617 = vrot.slane %v616, 1
        %v618 = vadd.f32 %v616, %v617
        %v619 = vadd.f32 %v603, %v605
        %v620 = vadd.f32 %v619, %v607
        %v621 = vadd.f32 %v620, %v609
        %v622 = vrot.slane %v621, 4
        %v623 = vadd.f32 %v621, %v622
        %v624 = vrot.slane %v623, 2
        %v625 = vadd.f32 %v623, %v624
        %v626 = vrot.slane %v625, 1
        %v627 = vadd.f32 %v625, %v626
        %v628 = vmul.f32 %v618, %v591
        %v629 = vmul.f32 %v627, %v591
        %v630 = vadd.f32 %v628, 1e-05
        %v631 = vadd.f32 %v629, 1e-05
        %v632 = vrsqrt.pop %v630
        %v633 = vrsqrt.pop %v631
        %v634 = vmul.f32 %v594, %v632
        %v635 = vmul.f32 %v595, %v633
        %v636 = vmul.f32 %v596, %v632
        %v637 = vmul.f32 %v597, %v633
        %v638 = vmul.f32 %v598, %v632
        %v639 = vmul.f32 %v599, %v633
        %v640 = vmul.f32 %v600, %v632
        %v641 = vmul.f32 %v601, %v633
        %643 = vset.pattern.permute.xlu0 0
        %644 = vperm.xlu0 %643, %v565
        %v645 = vpop.permute.xlu0 %644
        %648 = vset.pattern.permute.xlu0 0
        %649 = vperm.xlu0 %648, %v566
        %v650 = vpop.permute.xlu0 %649
        %653 = vset.pattern.permute.xlu0 0
        %654 = vperm.xlu0 %653, %v567
        %v655 = vpop.permute.xlu0 %654
        %658 = vset.pattern.permute.xlu0 0
        %659 = vperm.xlu0 %658, %v568
        %v660 = vpop.permute.xlu0 %659
        %v662 = vmul.f32 %v634, %v645
        %v663 = vmul.f32 %v635, %v645
        %v664 = vmul.f32 %v636, %v650
        %v665 = vmul.f32 %v637, %v650
        %v666 = vmul.f32 %v638, %v655
        %v667 = vmul.f32 %v639, %v655
        %v668 = vmul.f32 %v640, %v660
        %v669 = vmul.f32 %v641, %v660
        %671 = vset.pattern.permute.xlu0 0
        %672 = vperm.xlu0 %671, %v569
        %v673 = vpop.permute.xlu0 %672
        %676 = vset.pattern.permute.xlu0 0
        %677 = vperm.xlu0 %676, %v570
        %v678 = vpop.permute.xlu0 %677
        %681 = vset.pattern.permute.xlu0 0
        %682 = vperm.xlu0 %681, %v571
        %v683 = vpop.permute.xlu0 %682
        %686 = vset.pattern.permute.xlu0 0
        %687 = vperm.xlu0 %686, %v572
        %v688 = vpop.permute.xlu0 %687
        %v690 = vadd.f32 %v662, %v673
        %v691 = vadd.f32 %v663, %v673
        %v692 = vadd.f32 %v664, %v678
        %v693 = vadd.f32 %v665, %v678
        %v694 = vadd.f32 %v666, %v683
        %v695 = vadd.f32 %v667, %v683
        %v696 = vadd.f32 %v668, %v688
        %v697 = vadd.f32 %v669, %v688
        %v698 = vpack.c.bf16 %v692, %v690
        %v699 = vpack.c.bf16 %v693, %v691
        %v700 = vpack.c.bf16 %v696, %v694
        %v701 = vpack.c.bf16 %v697, %v695
        %v702 = vld [vmem:[%s5] sm:$0xf]
        %v703 = vld [vmem:[%s5 + $0x4] sm:$0xf]
        %v704 = vld [vmem:[%s5 + $0x8] sm:$0xf]
        %v705 = vld [vmem:[%s5 + $0xc] sm:$0xf]
        %v706 = vld [vmem:[%s6] sm:$0xff]
        %v707 = vld [vmem:[%s6 + $0x8] sm:$0xff]
        %v708 = vld [vmem:[%s6 + $0x10] sm:$0xff]
        %v709 = vld [vmem:[%s6 + $0x18] sm:$0xff]
        %711 = vset.pattern.permute.xlu0 0
        %712 = vperm.xlu0 %711, %v706
        %v713 = vpop.permute.xlu0 %712
        %716 = vset.pattern.permute.xlu0 0
        %717 = vperm.xlu0 %716, %v707
        %v718 = vpop.permute.xlu0 %717
        %721 = vset.pattern.permute.xlu0 0
        %722 = vperm.xlu0 %721, %v708
        %v723 = vpop.permute.xlu0 %722
        %726 = vset.pattern.permute.xlu0 0
        %727 = vperm.xlu0 %726, %v709
        %v728 = vpop.permute.xlu0 %727
        %v734 = vunpack.c.l.b16 %v702
        %v735 = vunpack.c.l.b16 %v703
        %v736 = vunpack.c.l.b16 %v704
        %v737 = vunpack.c.l.b16 %v705
        %v738 = vpack.c.b16 %v735, %v734
        %v739 = vpack.c.b16 %v737, %v736
        %v741 = vsel %vm497, %v738, 0
        %v744 = vsel %vm497, %v739, 0
        %746 = vmatprep.subr.bf16.mxu0 %v699
        %747 = vmatpush1.bf16.msra.mxu0 %v698
        %748 = vmatprep.subr.bf16.mxu0 %v701
        %749 = vmatpush1.bf16.msra.mxu0 %v700
        %750 = vmatprep.subr.bf16.mxu0 0
        %751 = vmatpush1.bf16.msra.mxu0 0
        %752 = vmatprep.subr.bf16.mxu0 0
        %753 = vmatpush1.bf16.msra.mxu0 0
        %754 = vmatprep.subr.bf16.mxu0 0
        %755 = vmatpush1.bf16.msra.mxu0 0
        %756 = vmatprep.subr.bf16.mxu0 0
        %757 = vmatpush1.bf16.msra.mxu0 0
        %758 = vmatprep.subr.bf16.mxu0 0
        %759 = vmatpush1.bf16.msra.mxu0 0
        %760 = vmatprep.subr.bf16.mxu0 0
        %761 = vmatpush1.bf16.msra.mxu0 0
        %762 = vmatprep.subr.bf16.mxu0 0
        %763 = vmatpush1.bf16.msra.mxu0 0
        %764 = vmatprep.subr.bf16.mxu0 0
        %765 = vmatpush1.bf16.msra.mxu0 0
        %766 = vmatprep.subr.bf16.mxu0 0
        %767 = vmatpush1.bf16.msra.mxu0 0
        %768 = vmatprep.subr.bf16.mxu0 0
        %769 = vmatpush1.bf16.msra.mxu0 0
        %770 = vmatprep.subr.bf16.mxu0 0
        %771 = vmatpush1.bf16.msra.mxu0 0
        %772 = vmatprep.subr.bf16.mxu0 0
        %773 = vmatpush1.bf16.msra.mxu0 0
        %774 = vmatprep.subr.bf16.mxu0 0
        %775 = vmatpush1.bf16.msra.mxu0 0
        %776 = vmatprep.subr.bf16.mxu0 0
        %777 = vmatpush1.bf16.msra.mxu0 0
        %778 = vmatprep.mubr.bf16.mxu0 0
        %779 = vmatmul.mubr.bf16.gmra.mrb[0].mxu0 %v741
        %v780 = vpop.f32.mrb[0].mxu0
        %v781 = vadd.f32 %v713, %v780
        %v782 = vpop.f32.mrb[0].mxu0
        %v783 = vadd.f32 %v713, %v782
        %v784 = vpop.f32.mrb[0].mxu0
        %v785 = vadd.f32 %v718, %v784
        %v786 = vpop.f32.mrb[0].mxu0
        %v787 = vadd.f32 %v718, %v786
        %788 = vmatprep.mubr.bf16.mxu0 0
        %789 = vmatmul.mubr.bf16.gmra.mrb[0].mxu0 %v744
        %v790 = vpop.f32.mrb[0].mxu0
        %v791 = vadd.f32 %v723, %v790
        %v792 = vpop.f32.mrb[0].mxu0
        %v793 = vadd.f32 %v723, %v792
        %v794 = vpop.f32.mrb[0].mxu0
        %v795 = vadd.f32 %v728, %v794
        %v796 = vpop.f32.mrb[0].mxu0
        %v797 = vadd.f32 %v728, %v796
        %798 = vdwg.mxu0
        %v799 = vmax.f32 %v781, 0.0
        %v800 = vmax.f32 %v783, 0.0
        %v801 = vmax.f32 %v785, 0.0
        %v802 = vmax.f32 %v787, 0.0
        %v803 = vmax.f32 %v791, 0.0
        %v804 = vmax.f32 %v793, 0.0
        %v805 = vmax.f32 %v795, 0.0
        %v806 = vmax.f32 %v797, 0.0
        %v807 = vld [vmem:[%s7] sm:$0xff]
        %v808 = vld [vmem:[%s7 + $0x8] sm:$0xff]
        %v809 = vld [vmem:[%s7 + $0x10] sm:$0xff]
        %v810 = vld [vmem:[%s7 + $0x18] sm:$0xff]
        %v811 = vld [vmem:[%s8] sm:$0xff]
        %v812 = vld [vmem:[%s8 + $0x8] sm:$0xff]
        %v813 = vld [vmem:[%s8 + $0x10] sm:$0xff]
        %v814 = vld [vmem:[%s8 + $0x18] sm:$0xff]
        %v815 = vadd.f32 %v799, %v801
        %v816 = vadd.f32 %v815, %v803
        %v817 = vadd.f32 %v816, %v805
        %v818 = vrot.slane %v817, 4
        %v819 = vadd.f32 %v817, %v818
        %v820 = vrot.slane %v819, 2
        %v821 = vadd.f32 %v819, %v820
        %v822 = vrot.slane %v821, 1
        %v823 = vadd.f32 %v821, %v822
        %v824 = vadd.f32 %v800, %v802
        %v825 = vadd.f32 %v824, %v804
        %v826 = vadd.f32 %v825, %v806
        %v827 = vrot.slane %v826, 4
        %v828 = vadd.f32 %v826, %v827
        %v829 = vrot.slane %v828, 2
        %v830 = vadd.f32 %v828, %v829
        %v831 = vrot.slane %v830, 1
        %v832 = vadd.f32 %v830, %v831
        %v833 = vmul.f32 %v823, %v591
        %v834 = vmul.f32 %v832, %v591
        %v835 = vsub.f32 %v799, %v833
        %v836 = vsub.f32 %v800, %v834
        %v837 = vsub.f32 %v801, %v833
        %v838 = vsub.f32 %v802, %v834
        %v839 = vsub.f32 %v803, %v833
        %v840 = vsub.f32 %v804, %v834
        %v841 = vsub.f32 %v805, %v833
        %v842 = vsub.f32 %v806, %v834
        %v843 = vmul.f32 %v835, %v835
        %v844 = vmul.f32 %v836, %v836
        %v845 = vmul.f32 %v837, %v837
        %v846 = vmul.f32 %v838, %v838
        %v847 = vmul.f32 %v839, %v839
        %v848 = vmul.f32 %v840, %v840
        %v849 = vmul.f32 %v841, %v841
        %v850 = vmul.f32 %v842, %v842
        %v851 = vadd.f32 %v843, %v845
        %v852 = vadd.f32 %v851, %v847
        %v853 = vadd.f32 %v852, %v849
        %v854 = vrot.slane %v853, 4
        %v855 = vadd.f32 %v853, %v854
        %v856 = vrot.slane %v855, 2
        %v857 = vadd.f32 %v855, %v856
        %v858 = vrot.slane %v857, 1
        %v859 = vadd.f32 %v857, %v858
        %v860 = vadd.f32 %v844, %v846
        %v861 = vadd.f32 %v860, %v848
        %v862 = vadd.f32 %v861, %v850
        %v863 = vrot.slane %v862, 4
        %v864 = vadd.f32 %v862, %v863
        %v865 = vrot.slane %v864, 2
        %v866 = vadd.f32 %v864, %v865
        %v867 = vrot.slane %v866, 1
        %v868 = vadd.f32 %v866, %v867
        %v869 = vmul.f32 %v859, %v591
        %v870 = vmul.f32 %v868, %v591
        %v871 = vadd.f32 %v869, 1e-05
        %v872 = vadd.f32 %v870, 1e-05
        %v873 = vrsqrt.pop %v871
        %v874 = vrsqrt.pop %v872
        %v875 = vmul.f32 %v835, %v873
        %v876 = vmul.f32 %v836, %v874
        %v877 = vmul.f32 %v837, %v873
        %v878 = vmul.f32 %v838, %v874
        %v879 = vmul.f32 %v839, %v873
        %v880 = vmul.f32 %v840, %v874
        %v881 = vmul.f32 %v841, %v873
        %v882 = vmul.f32 %v842, %v874
        %884 = vset.pattern.permute.xlu0 0
        %885 = vperm.xlu0 %884, %v807
        %v886 = vpop.permute.xlu0 %885
        %889 = vset.pattern.permute.xlu0 0
        %890 = vperm.xlu0 %889, %v808
        %v891 = vpop.permute.xlu0 %890
        %894 = vset.pattern.permute.xlu0 0
        %895 = vperm.xlu0 %894, %v809
        %v896 = vpop.permute.xlu0 %895
        %899 = vset.pattern.permute.xlu0 0
        %900 = vperm.xlu0 %899, %v810
        %v901 = vpop.permute.xlu0 %900
        %v903 = vmul.f32 %v875, %v886
        %v904 = vmul.f32 %v876, %v886
        %v905 = vmul.f32 %v877, %v891
        %v906 = vmul.f32 %v878, %v891
        %v907 = vmul.f32 %v879, %v896
        %v908 = vmul.f32 %v880, %v896
        %v909 = vmul.f32 %v881, %v901
        %v910 = vmul.f32 %v882, %v901
        %912 = vset.pattern.permute.xlu0 0
        %913 = vperm.xlu0 %912, %v811
        %v914 = vpop.permute.xlu0 %913
        %917 = vset.pattern.permute.xlu0 0
        %918 = vperm.xlu0 %917, %v812
        %v919 = vpop.permute.xlu0 %918
        %922 = vset.pattern.permute.xlu0 0
        %923 = vperm.xlu0 %922, %v813
        %v924 = vpop.permute.xlu0 %923
        %927 = vset.pattern.permute.xlu0 0
        %928 = vperm.xlu0 %927, %v814
        %v929 = vpop.permute.xlu0 %928
        %v931 = vadd.f32 %v903, %v914
        %v932 = vadd.f32 %v904, %v914
        %v933 = vadd.f32 %v905, %v919
        %v934 = vadd.f32 %v906, %v919
        %v935 = vadd.f32 %v907, %v924
        %v936 = vadd.f32 %v908, %v924
        %v937 = vadd.f32 %v909, %v929
        %v938 = vadd.f32 %v910, %v929
        %v939 = vpack.c.bf16 %v933, %v931
        %v940 = vpack.c.bf16 %v934, %v932
        %v941 = vpack.c.bf16 %v937, %v935
        %v942 = vpack.c.bf16 %v938, %v936
        %v943 = vld [vmem:[%s9] sm:$0xf]
        %v944 = vld [vmem:[%s9 + $0x4] sm:$0xf]
        %v945 = vld [vmem:[%s10] sm:$0xff]
        %v946 = vld [vmem:[%s10 + $0x8] sm:$0xff]
        %948 = vset.pattern.permute.xlu0 0
        %949 = vperm.xlu0 %948, %v945
        %v950 = vpop.permute.xlu0 %949
        %953 = vset.pattern.permute.xlu0 0
        %954 = vperm.xlu0 %953, %v946
        %v955 = vpop.permute.xlu0 %954
        %v959 = vunpack.c.l.b16 %v943
        %v960 = vunpack.c.l.b16 %v944
        %v961 = vpack.c.b16 %v960, %v959
        %v963 = vsel %vm497, %v961, 0
        %965 = vmatprep.subr.bf16.mxu0 %v940
        %966 = vmatpush1.bf16.msra.mxu0 %v939
        %967 = vmatprep.subr.bf16.mxu0 %v942
        %968 = vmatpush1.bf16.msra.mxu0 %v941
        %969 = vmatprep.subr.bf16.mxu0 0
        %970 = vmatpush1.bf16.msra.mxu0 0
        %971 = vmatprep.subr.bf16.mxu0 0
        %972 = vmatpush1.bf16.msra.mxu0 0
        %973 = vmatprep.subr.bf16.mxu0 0
        %974 = vmatpush1.bf16.msra.mxu0 0
        %975 = vmatprep.subr.bf16.mxu0 0
        %976 = vmatpush1.bf16.msra.mxu0 0
        %977 = vmatprep.subr.bf16.mxu0 0
        %978 = vmatpush1.bf16.msra.mxu0 0
        %979 = vmatprep.subr.bf16.mxu0 0
        %980 = vmatpush1.bf16.msra.mxu0 0
        %981 = vmatprep.subr.bf16.mxu0 0
        %982 = vmatpush1.bf16.msra.mxu0 0
        %983 = vmatprep.subr.bf16.mxu0 0
        %984 = vmatpush1.bf16.msra.mxu0 0
        %985 = vmatprep.subr.bf16.mxu0 0
        %986 = vmatpush1.bf16.msra.mxu0 0
        %987 = vmatprep.subr.bf16.mxu0 0
        %988 = vmatpush1.bf16.msra.mxu0 0
        %989 = vmatprep.subr.bf16.mxu0 0
        %990 = vmatpush1.bf16.msra.mxu0 0
        %991 = vmatprep.subr.bf16.mxu0 0
        %992 = vmatpush1.bf16.msra.mxu0 0
        %993 = vmatprep.subr.bf16.mxu0 0
        %994 = vmatpush1.bf16.msra.mxu0 0
        %995 = vmatprep.subr.bf16.mxu0 0
        %996 = vmatpush1.bf16.msra.mxu0 0
        %997 = vmatprep.mubr.bf16.mxu0 0
        %998 = vmatmul.mubr.bf16.gmra.mrb[0].mxu0 %v963
        %v999 = vpop.f32.mrb[0].mxu0
        %v1000 = vadd.f32 %v950, %v999
        %v1001 = vpop.f32.mrb[0].mxu0
        %v1002 = vadd.f32 %v950, %v1001
        %v1003 = vpop.f32.mrb[0].mxu0
        %v1004 = vadd.f32 %v955, %v1003
        %v1005 = vpop.f32.mrb[0].mxu0
        %v1006 = vadd.f32 %v955, %v1005
        %1007 = vdwg.mxu0
        %1008 = vst [vmem:[%s431] sm:$0xff] %v1000
        %1009 = vst [vmem:[%s431 + $0x8] sm:$0xff] %v1002
        %1010 = vst [vmem:[%s431 + $0x10] sm:$0xff] %v1004
        %1011 = vst [vmem:[%s431 + $0x18] sm:$0xff] %v1006
        %s1012 = sand.u32 %s269, 1
        %s1013 = scalar_lea.sflag [#allocation4], %s1012
        %s1014 = sand.u32 %s269, 1
        %s1015 = smul.addr %s1014, 32
        %s1016 = scalar_lea.vmem [#allocation3], %s1015
        // Predicated region
        $region103: #{tpu_custom_call.1} parent=97 // pred_check
          %p1017 = pneg %p279
        $region104: #{tpu_custom_call.1} parent=97 // pred_check_branch
          %1019 = sbr.rel (%p1017) target = $region106
        $region105: #{tpu_custom_call.1} parent=97 // pred_region
          %s1020 = smul.u32 2, %s25
          %s1022 = ssub.s32 512, 512
          %1023 = vsyncadd %s1013, %s1022
          %s1024 = smul.addr %s1020, 128
          %s1025 = scalar_lea.hbm %s11, %s1024
          %s1026 = sshll.u32 %s1016, 4
          %s1027 = int_to_ptr.vmem [resolvable:$true] %s1026
          %1032 = dma.vmem_to_hbm [thread:$0]  %s1027, 512, %s1025, %s1013, 256, 512, 16
        $region106: #{tpu_custom_call.1} parent=97 // pred_fallthru
          _
      $region98: #{tpu_custom_call.1} parent=5 // pred_fallthru
        _
      %p1033 = scmp.le.s32.totalorder 2, %s20
      // Predicated region
      $region107: #{tpu_custom_call.1} parent=5 // pred_check
        %p1034 = pneg %p1033
      $region108: #{tpu_custom_call.1} parent=5 // pred_check_branch
        %1036 = sbr.rel (%p1034) target = $region110
      $region109: #{tpu_custom_call.1} parent=5 // pred_region
        %s1037 = ssub.s32 %s20, 2
        // Predicated region
        $region111: #{tpu_custom_call.1} parent=109 // pred_check
          %p1038 = pneg %p285
        $region112: #{tpu_custom_call.1} parent=109 // pred_check_branch
          %1040 = sbr.rel (%p1038) target = $region114
        $region113: #{tpu_custom_call.1} parent=109 // pred_region
          %s1041 = sand.u32 %s270, 1
          %s1042 = scalar_lea.sflag [#allocation4], %s1041
          %s1043 = sand.u32 %s270, 1
          %s1044 = smul.addr %s1043, 32
          %s1045 = scalar_lea.vmem [#allocation3], %s1044
          %1046 = dma.done %s1042, 512
        $region114: #{tpu_custom_call.1} parent=109 // pred_fallthru
          _
      $region110: #{tpu_custom_call.1} parent=5 // pred_fallthru
        _
    $region6: #{tpu_custom_call.1} parent=1 // loop_footer
      %s24 = sadd.s32 1, %s20
    $region7: #{tpu_custom_call.1} parent=1 // loop_footer_branch
      %19 = sbr.rel target = $region3
    $region8: #{tpu_custom_call.1} parent=1 // loop_exit
      _
    %1047 = vsyncpa [#allocation4], 1
    %s1048 = scalar_lea.sflag [#allocation4], 1
    %1049 = vsyncpa %s1048, 1

</llo_original>
